<compile_context>
chip_gen: v7x
topology: tpu7x:2x2x1
jax: 0.10.0
libtpu: 0.0.40
codegen_flags: <defaults>
</compile_context>

<pallas_src>
import functools

import jax
import jax.numpy as jnp
from jax.experimental import pallas as pl
from jax.experimental.pallas import tpu as pltpu


def _round_up(a: int, b: int) -> int:
    return (a + b - 1) // b * b


def _pick_act_dtype(matmul_dtype):
    """bf16 elementwise math only on chips with bf16 VPU/EUP (v6e / v7x)."""
    if matmul_dtype != jnp.bfloat16:
        return jnp.float32
    try:
        kind = jax.devices()[0].device_kind.lower()
    except Exception:
        return jnp.float32
    if ("v6" in kind) or ("v7" in kind):
        return jnp.bfloat16
    return jnp.float32            # v5e and older: no bf16 VALU/EUP


def _per_row_vmem_bytes(N, in_dim, xs_itemsize, dense):
    """Padded VMEM bytes per batch element: (xs-only, total double-buffered)."""
    lanes_in = _round_up(max(in_dim, 1), 128)          # in_dim pads to 128 lanes
    xs_per = N * lanes_in * xs_itemsize
    if dense:
        xv_per = _round_up(N, 128) * 4                 # (TB, N) f32 row
    else:
        xv_per = _round_up(N, 8) * 128 * 4             # (TB, N, 1) f32 tile
    out_per = 128 * 4                                  # (TB, 1) f32 row
    total = 2 * (xs_per + 2 * xv_per + out_per)        # double-buffered streams
    return xs_per, total


# --------------------------------------------------------------------------
# Kernel: one tile of TB batch elements per grid step.
# --------------------------------------------------------------------------
def _mlpw_kernel(n_layers, n_seq, dense_softmax, act_dtype, *refs):
    xs_ref, x_ref, valid_ref = refs[0], refs[1], refs[2]
    layer_refs = refs[3:3 + 2 * n_layers]
    ww_ref = refs[3 + 2 * n_layers]          # (1, n_dim)  f32
    bw_ref = refs[4 + 2 * n_layers]          # (1, 1)      f32
    out_ref = refs[5 + 2 * n_layers]         # (TB, 1)     f32

    rows, _ = xs_ref.shape                   # rows == TB * N (flattened host-side)
    N = n_seq
    TB = rows // N

    # ---- self.dist(xs): (Linear + GELU) stack on the flat (TB*N, in_dim) slab.
    h = xs_ref[...]                          # bf16 (or f32) straight from DMA
    for i in range(n_layers):
        w = layer_refs[2 * i][...]           # (d_in, n_dim)  matmul dtype
        b = layer_refs[2 * i + 1][...]       # (1, n_dim)     act dtype
        if h.dtype != w.dtype:
            h = h.astype(w.dtype)
        h = jnp.dot(h, w, preferred_element_type=jnp.float32)     # MXU, f32 acc
        h = jax.nn.gelu(h.astype(act_dtype) + b, approximate=True)  # VPU/EUP

    # ---- weight head (n_dim -> 1): VPU multiply + cross-lane reduce (f32 by
    # promotion); keeps the MXU free of a 1-lane-wide matmul.
    logits_col = jnp.sum(h * ww_ref[...], axis=-1, keepdims=True) + bw_ref[...]

    if dense_softmax:
        # Large N: N on the lane axis (one sublane->lane relayout per step).
        logits = logits_col.reshape(TB, N)
        xv, vv = x_ref[...], valid_ref[...]          # (TB, N) f32
        axis = -1
    else:
        # Small N: keep N on the sublane axis (leading-dim split only).
        logits = logits_col.reshape(TB, N, 1)
        xv, vv = x_ref[...], valid_ref[...]          # (TB, N, 1) f32
        axis = 1

    # softmax over N, mask by valid, renormalize (all f32).
    m = jnp.max(logits, axis=axis, keepdims=True)
    e = jnp.exp(logits - m)
    sm = e * pl.reciprocal(jnp.sum(e, axis=axis, keepdims=True), approx=True)
    wts = sm * vv
    wts = wts / (jnp.sum(wts, axis=axis, keepdims=True) + 1e-8)   # exact renorm

    if dense_softmax:
        out_ref[...] = jnp.sum(xv * wts, axis=-1, keepdims=True)  # (TB, 1)
    else:
        out_ref[...] = jnp.sum(xv * wts, axis=1)                  # (TB, 1)


# --------------------------------------------------------------------------
# Wrapper
# --------------------------------------------------------------------------
def mlpw_forward(xs, x, valid, layer_params, ww, bw, *,
                 matmul_dtype=jnp.bfloat16, act_dtype=None, block_b=None,
                 dense_n_threshold=64):
    """MLPW forward.  xs: (B, N, in_dim); x, valid: (B, N, 1) -> (B, 1, 1)."""
    B, N, in_dim = xs.shape
    # TODO(synk): only the x.shape[-1] == 1 case (what MLPW.forward uses) is
    # implemented here.
    assert x.shape == (B, N, 1) and valid.shape == (B, N, 1)
    n_layers = len(layer_params)

    if act_dtype is None:
        act_dtype = _pick_act_dtype(matmul_dtype)
    dense = N >= dense_n_threshold

    xs = xs.astype(matmul_dtype)             # bf16 DMA: halves the dominant HBM stream
    x = x.astype(jnp.float32)
    valid = valid.astype(jnp.float32)
    xs_itemsize = jnp.dtype(matmul_dtype).itemsize

    # ---- tile sizing by padded bytes ------------------------------------
    xs_per, per_elem = _per_row_vmem_bytes(N, in_dim, xs_itemsize, dense)
    if block_b is None:
        TB = max(8, (2 << 20) // xs_per)               # ~2 MiB xs tile per step
        TB = min(TB, max(8, (40 << 20) // per_elem))   # stay under VMEM budget
    else:
        TB = block_b
    TB = max(8, (TB // 8) * 8)
    bp8 = _round_up(B, 8)
    TB = min(TB, bp8)
    if bp8 > 8 and TB >= bp8:
        # v7x megacore: keep >= 2 tiles on the single "parallel" grid axis.
        TB = _round_up(-(-bp8 // 2), 8)

    num_tiles = -(-B // TB)
    Bp = num_tiles * TB
    if Bp != B:
        pad = ((0, Bp - B), (0, 0), (0, 0))            # padded rows: valid == 0
        xs = jnp.pad(xs, pad)
        x = jnp.pad(x, pad)
        valid = jnp.pad(valid, pad)

    xs_flat = xs.reshape(Bp * N, in_dim)               # host-side flatten (free)

    # ---- parameters -------------------------------------------------------
    flat_params = []
    for (w, b) in layer_params:
        flat_params += [w.astype(matmul_dtype),
                        jnp.asarray(b).reshape(1, -1).astype(act_dtype)]
    ww_row = jnp.asarray(ww).reshape(1, -1).astype(jnp.float32)   # (1, n_dim)
    bw_s = jnp.asarray(bw).reshape(1, 1).astype(jnp.float32)      # (1, 1)
    param_arrays = flat_params + [ww_row, bw_s]
    # Constant per-step blocks; VMEM cost is tiny, so default buffering is fine.
    param_specs = [pl.BlockSpec(p.shape, lambda b: (0, 0)) for p in param_arrays]

    in_specs = [pl.BlockSpec((TB * N, in_dim), lambda b: (b, 0))]
    if dense:
        x_in, v_in = x[..., 0], valid[..., 0]                      # (Bp, N)
        in_specs += [pl.BlockSpec((TB, N), lambda b: (b, 0)),
                     pl.BlockSpec((TB, N), lambda b: (b, 0))]
    else:
        x_in, v_in = x, valid                                      # (Bp, N, 1)
        in_specs += [pl.BlockSpec((TB, N, 1), lambda b: (b, 0, 0)),
                     pl.BlockSpec((TB, N, 1), lambda b: (b, 0, 0))]
    in_specs += param_specs

    # Explicit scoped-VMEM limit: above the v5e 16 MiB default, below v7x's
    # 64 MiB physical (review budget ~48 MiB).
    params_bytes = sum(int(p.size) * p.dtype.itemsize for p in param_arrays)
    est = TB * per_elem + 2 * params_bytes + (2 << 20)
    vmem_limit = int(min(48 << 20, max(32 << 20, est)))

    out = pl.pallas_call(
        functools.partial(_mlpw_kernel, n_layers, N, dense, act_dtype),
        out_shape=jax.ShapeDtypeStruct((Bp, 1), jnp.float32),
        grid=(num_tiles,),
        in_specs=in_specs,
        out_specs=pl.BlockSpec((TB, 1), lambda b: (b, 0)),
        compiler_params=pltpu.CompilerParams(
            dimension_semantics=("parallel",),
            vmem_limit_bytes=vmem_limit),
    )(xs_flat, x_in, v_in, *param_arrays)

    return out[:B].reshape(B, 1, 1)


# --------------------------------------------------------------------------
# Pure-JAX reference (eval-mode PyTorch semantics, f32).
# --------------------------------------------------------------------------
def _reference(xs, x, valid, layer_params, ww, bw):
    h = xs
    for (w, b) in layer_params:
        h = jax.nn.gelu(h @ w + b, approximate=True)
    logits = h @ ww + bw                                   # (B, N, 1)
    sm = jax.nn.softmax(logits, axis=1) * valid
    wts = sm / (jnp.sum(sm, axis=1, keepdims=True) + 1e-8)
    return jnp.sum(x * wts, axis=1, keepdims=True)         # (B, 1, 1)


if __name__ == "__main__":
    B, N, in_dim, n_dim, n_layers = 2, 8, 16, 32, 2

    key = jax.random.PRNGKey(0)
    keys = jax.random.split(key, 4 + n_layers)

    xs = jax.random.normal(keys[0], (B, N, in_dim), dtype=jnp.float32)
    x = jax.random.normal(keys[1], (B, N, 1), dtype=jnp.float32)
    valid = (jax.random.uniform(keys[2], (B, N, 1)) > 0.2).astype(jnp.float32)

    layer_params = []
    d = in_dim
    for i in range(n_layers):
        kw, kb = jax.random.split(keys[3 + i])
        w = jax.random.normal(kw, (d, n_dim), dtype=jnp.float32) * 0.1
        b = jax.random.normal(kb, (1, n_dim), dtype=jnp.float32) * 0.01
        layer_params.append((w, b))
        d = n_dim
    kw, _ = jax.random.split(keys[3 + n_layers])
    ww = jax.random.normal(kw, (n_dim, 1), dtype=jnp.float32) * 0.1
    bw = jnp.zeros((1, 1), dtype=jnp.float32)

    ref = _reference(xs, x, valid, layer_params, ww, bw)

    out = jax.block_until_ready(
        mlpw_forward(xs, x, valid, layer_params, ww, bw))

    assert out.shape == (B, 1, 1), out.shape
    # Loose-ish tolerance: bf16 xs/matmuls (+ bf16 GELU on v6e/v7x) vs f32 ref.
    assert bool(jnp.allclose(out, ref, atol=2e-2, rtol=2e-2)), (
        "kernel/reference mismatch:\n"
        f"kernel={out.ravel()}\nref={ref.ravel()}")
    print("KERNEL_OK")
</pallas_src>

<mosaic_0001>
module attributes {stable_mosaic.version = 11 : i64} {
  func.func @_mlpw_kernel(%arg0: i32, %arg1: memref<64x16xbf16, #tpu.memory_space<vmem>>, %arg2: memref<8x8x1xf32, #tpu.memory_space<vmem>>, %arg3: memref<8x8x1xf32, #tpu.memory_space<vmem>>, %arg4: memref<16x32xbf16, #tpu.memory_space<vmem>>, %arg5: memref<1x32xf32, #tpu.memory_space<vmem>>, %arg6: memref<32x32xbf16, #tpu.memory_space<vmem>>, %arg7: memref<1x32xf32, #tpu.memory_space<vmem>>, %arg8: memref<1x32xf32, #tpu.memory_space<vmem>>, %arg9: memref<1x1xf32, #tpu.memory_space<vmem>>, %arg10: memref<8x1xf32, #tpu.memory_space<vmem>>) attributes {dimension_semantics = [#tpu.dimension_semantics<parallel>], iteration_bounds = array<i64: 1>, scalar_prefetch = 0 : i64, scratch_operands = 0 : i64, tpu.core_type = #tpu.core_type<tc>, window_params = [{transform_indices = @transform_0, window_bounds = array<i64: 64, 16>}, {transform_indices = @transform_1, window_bounds = array<i64: 8, 8, 1>}, {transform_indices = @transform_2, window_bounds = array<i64: 8, 8, 1>}, {pipeline_mode = #tpu.pipeline_mode<synchronous>, transform_indices = @transform_3, window_bounds = array<i64: 16, 32>}, {pipeline_mode = #tpu.pipeline_mode<synchronous>, transform_indices = @transform_4, window_bounds = array<i64: 1, 32>}, {pipeline_mode = #tpu.pipeline_mode<synchronous>, transform_indices = @transform_5, window_bounds = array<i64: 32, 32>}, {pipeline_mode = #tpu.pipeline_mode<synchronous>, transform_indices = @transform_6, window_bounds = array<i64: 1, 32>}, {pipeline_mode = #tpu.pipeline_mode<synchronous>, transform_indices = @transform_7, window_bounds = array<i64: 1, 32>}, {pipeline_mode = #tpu.pipeline_mode<synchronous>, transform_indices = @transform_8, window_bounds = array<i64: 1, 1>}, {transform_indices = @transform_9, window_bounds = array<i64: 8, 1>}]} {
    %c0 = arith.constant 0 : index
    %c0_0 = arith.constant 0 : index
    %0 = vector.load %arg1[%c0, %c0_0] : memref<64x16xbf16, #tpu.memory_space<vmem>>, vector<64x16xbf16>
    %c0_1 = arith.constant 0 : index
    %c0_2 = arith.constant 0 : index
    %1 = vector.load %arg4[%c0_1, %c0_2] : memref<16x32xbf16, #tpu.memory_space<vmem>>, vector<16x32xbf16>
    %c0_3 = arith.constant 0 : index
    %c0_4 = arith.constant 0 : index
    %2 = vector.load %arg5[%c0_3, %c0_4] : memref<1x32xf32, #tpu.memory_space<vmem>>, vector<1x32xf32>
    %cst = arith.constant dense<0.000000e+00> : vector<64x32xf32>
    %3 = tpu.matmul %0, %1, %cst {dimension_numbers = #tpu.dot_dimension_numbers<[1], [0], [0], [1], [0, 0, 1, 1], [], []>} : vector<64x16xbf16>, vector<16x32xbf16>, vector<64x32xf32> -> vector<64x32xf32>
    %4 = vector.broadcast %2 : vector<1x32xf32> to vector<64x32xf32>
    %5 = arith.addf %3, %4 : vector<64x32xf32>
    %6 = arith.mulf %5, %5 : vector<64x32xf32>
    %7 = arith.mulf %5, %6 : vector<64x32xf32>
    %cst_5 = arith.constant 4.471500e-02 : f32
    %8 = vector.broadcast %cst_5 : f32 to vector<64x32xf32>
    %9 = arith.mulf %8, %7 : vector<64x32xf32>
    %10 = arith.addf %5, %9 : vector<64x32xf32>
    %cst_6 = arith.constant 0.797884583 : f32
    %11 = vector.broadcast %cst_6 : f32 to vector<64x32xf32>
    %12 = arith.mulf %11, %10 : vector<64x32xf32>
    %13 = math.tanh %12 : vector<64x32xf32>
    %cst_7 = arith.constant 1.000000e+00 : f32
    %14 = vector.broadcast %cst_7 : f32 to vector<64x32xf32>
    %15 = arith.addf %14, %13 : vector<64x32xf32>
    %cst_8 = arith.constant 5.000000e-01 : f32
    %16 = vector.broadcast %cst_8 : f32 to vector<64x32xf32>
    %17 = arith.mulf %16, %15 : vector<64x32xf32>
    %18 = arith.mulf %5, %17 : vector<64x32xf32>
    %c0_9 = arith.constant 0 : index
    %c0_10 = arith.constant 0 : index
    %19 = vector.load %arg6[%c0_9, %c0_10] : memref<32x32xbf16, #tpu.memory_space<vmem>>, vector<32x32xbf16>
    %c0_11 = arith.constant 0 : index
    %c0_12 = arith.constant 0 : index
    %20 = vector.load %arg7[%c0_11, %c0_12] : memref<1x32xf32, #tpu.memory_space<vmem>>, vector<1x32xf32>
    %21 = arith.truncf %18 : vector<64x32xf32> to vector<64x32xbf16>
    %cst_13 = arith.constant dense<0.000000e+00> : vector<64x32xf32>
    %22 = tpu.matmul %21, %19, %cst_13 {dimension_numbers = #tpu.dot_dimension_numbers<[1], [0], [0], [1], [0, 0, 1, 1], [], []>} : vector<64x32xbf16>, vector<32x32xbf16>, vector<64x32xf32> -> vector<64x32xf32>
    %23 = vector.broadcast %20 : vector<1x32xf32> to vector<64x32xf32>
    %24 = arith.addf %22, %23 : vector<64x32xf32>
    %25 = arith.mulf %24, %24 : vector<64x32xf32>
    %26 = arith.mulf %24, %25 : vector<64x32xf32>
    %cst_14 = arith.constant 4.471500e-02 : f32
    %27 = vector.broadcast %cst_14 : f32 to vector<64x32xf32>
    %28 = arith.mulf %27, %26 : vector<64x32xf32>
    %29 = arith.addf %24, %28 : vector<64x32xf32>
    %cst_15 = arith.constant 0.797884583 : f32
    %30 = vector.broadcast %cst_15 : f32 to vector<64x32xf32>
    %31 = arith.mulf %30, %29 : vector<64x32xf32>
    %32 = math.tanh %31 : vector<64x32xf32>
    %cst_16 = arith.constant 1.000000e+00 : f32
    %33 = vector.broadcast %cst_16 : f32 to vector<64x32xf32>
    %34 = arith.addf %33, %32 : vector<64x32xf32>
    %cst_17 = arith.constant 5.000000e-01 : f32
    %35 = vector.broadcast %cst_17 : f32 to vector<64x32xf32>
    %36 = arith.mulf %35, %34 : vector<64x32xf32>
    %37 = arith.mulf %24, %36 : vector<64x32xf32>
    %c0_18 = arith.constant 0 : index
    %c0_19 = arith.constant 0 : index
    %38 = vector.load %arg8[%c0_18, %c0_19] : memref<1x32xf32, #tpu.memory_space<vmem>>, vector<1x32xf32>
    %39 = vector.broadcast %38 : vector<1x32xf32> to vector<64x32xf32>
    %40 = arith.mulf %37, %39 : vector<64x32xf32>
    %cst_20 = arith.constant dense<0.000000e+00> : vector<64xf32>
    %41 = vector.multi_reduction <add>, %40, %cst_20 [1] : vector<64x32xf32> to vector<64xf32>
    %42 = vector.shape_cast %41 : vector<64xf32> to vector<64x1xf32>
    %c0_21 = arith.constant 0 : index
    %c0_22 = arith.constant 0 : index
    %43 = vector.load %arg9[%c0_21, %c0_22] : memref<1x1xf32, #tpu.memory_space<vmem>>, vector<1x1xf32>
    %44 = vector.broadcast %43 : vector<1x1xf32> to vector<64x1xf32>
    %45 = arith.addf %42, %44 : vector<64x1xf32>
    %46 = vector.shape_cast %45 : vector<64x1xf32> to vector<8x8x1xf32>
    %c0_23 = arith.constant 0 : index
    %c0_24 = arith.constant 0 : index
    %c0_25 = arith.constant 0 : index
    %47 = vector.load %arg2[%c0_23, %c0_24, %c0_25] : memref<8x8x1xf32, #tpu.memory_space<vmem>>, vector<8x8x1xf32>
    %c0_26 = arith.constant 0 : index
    %c0_27 = arith.constant 0 : index
    %c0_28 = arith.constant 0 : index
    %48 = vector.load %arg3[%c0_26, %c0_27, %c0_28] : memref<8x8x1xf32, #tpu.memory_space<vmem>>, vector<8x8x1xf32>
    %cst_29 = arith.constant dense<0xFF800000> : vector<8x1xf32>
    %49 = vector.multi_reduction <maximumf>, %46, %cst_29 [1] : vector<8x8x1xf32> to vector<8x1xf32>
    %50 = vector.shape_cast %49 : vector<8x1xf32> to vector<8x1x1xf32>
    %51 = vector.broadcast %50 : vector<8x1x1xf32> to vector<8x8x1xf32>
    %52 = arith.subf %46, %51 : vector<8x8x1xf32>
    %53 = math.exp %52 : vector<8x8x1xf32>
    %cst_30 = arith.constant dense<0.000000e+00> : vector<8x1xf32>
    %54 = vector.multi_reduction <add>, %53, %cst_30 [1] : vector<8x8x1xf32> to vector<8x1xf32>
    %55 = vector.shape_cast %54 : vector<8x1xf32> to vector<8x1x1xf32>
    %56 = tpu.reciprocal %55 {approx = true} : vector<8x1x1xf32> -> vector<8x1x1xf32>
    %57 = vector.broadcast %56 : vector<8x1x1xf32> to vector<8x8x1xf32>
    %58 = arith.mulf %53, %57 : vector<8x8x1xf32>
    %59 = arith.mulf %58, %48 : vector<8x8x1xf32>
    %cst_31 = arith.constant dense<0.000000e+00> : vector<8x1xf32>
    %60 = vector.multi_reduction <add>, %59, %cst_31 [1] : vector<8x8x1xf32> to vector<8x1xf32>
    %61 = vector.shape_cast %60 : vector<8x1xf32> to vector<8x1x1xf32>
    %cst_32 = arith.constant 9.99999993E-9 : f32
    %62 = vector.broadcast %cst_32 : f32 to vector<8x1x1xf32>
    %63 = arith.addf %61, %62 : vector<8x1x1xf32>
    %64 = vector.broadcast %63 : vector<8x1x1xf32> to vector<8x8x1xf32>
    %65 = arith.divf %59, %64 : vector<8x8x1xf32>
    %66 = arith.mulf %47, %65 : vector<8x8x1xf32>
    %cst_33 = arith.constant dense<0.000000e+00> : vector<8x1xf32>
    %67 = vector.multi_reduction <add>, %66, %cst_33 [1] : vector<8x8x1xf32> to vector<8x1xf32>
    %c0_34 = arith.constant 0 : index
    %c0_35 = arith.constant 0 : index
    %68 = vector.load %arg10[%c0_34, %c0_35] : memref<8x1xf32, #tpu.memory_space<vmem>>, vector<8x1xf32>
    tpu.vector_store %arg10[%c0_34, %c0_35], %67 {strides = array<i32>} : memref<8x1xf32, #tpu.memory_space<vmem>>, vector<8x1xf32>,
    return
  }
  func.func @transform_0(%arg0: i32) -> (i32, i32) {
    %c0_i32 = arith.constant 0 : i32
    %c0_i32_0 = arith.constant 0 : i32
    return %arg0, %c0_i32 : i32, i32
  }
  func.func @transform_1(%arg0: i32) -> (i32, i32, i32) {
    %c0_i32 = arith.constant 0 : i32
    %c0_i32_0 = arith.constant 0 : i32
    %c0_i32_1 = arith.constant 0 : i32
    return %arg0, %c0_i32, %c0_i32_0 : i32, i32, i32
  }
  func.func @transform_2(%arg0: i32) -> (i32, i32, i32) {
    %c0_i32 = arith.constant 0 : i32
    %c0_i32_0 = arith.constant 0 : i32
    %c0_i32_1 = arith.constant 0 : i32
    return %arg0, %c0_i32, %c0_i32_0 : i32, i32, i32
  }
  func.func @transform_3(%arg0: i32) -> (i32, i32) {
    %c0_i32 = arith.constant 0 : i32
    %c0_i32_0 = arith.constant 0 : i32
    %c0_i32_1 = arith.constant 0 : i32
    return %c0_i32, %c0_i32_0 : i32, i32
  }
  func.func @transform_4(%arg0: i32) -> (i32, i32) {
    %c0_i32 = arith.constant 0 : i32
    %c0_i32_0 = arith.constant 0 : i32
    %c0_i32_1 = arith.constant 0 : i32
    return %c0_i32, %c0_i32_0 : i32, i32
  }
  func.func @transform_5(%arg0: i32) -> (i32, i32) {
    %c0_i32 = arith.constant 0 : i32
    %c0_i32_0 = arith.constant 0 : i32
    %c0_i32_1 = arith.constant 0 : i32
    return %c0_i32, %c0_i32_0 : i32, i32
  }
  func.func @transform_6(%arg0: i32) -> (i32, i32) {
    %c0_i32 = arith.constant 0 : i32
    %c0_i32_0 = arith.constant 0 : i32
    %c0_i32_1 = arith.constant 0 : i32
    return %c0_i32, %c0_i32_0 : i32, i32
  }
  func.func @transform_7(%arg0: i32) -> (i32, i32) {
    %c0_i32 = arith.constant 0 : i32
    %c0_i32_0 = arith.constant 0 : i32
    %c0_i32_1 = arith.constant 0 : i32
    return %c0_i32, %c0_i32_0 : i32, i32
  }
  func.func @transform_8(%arg0: i32) -> (i32, i32) {
    %c0_i32 = arith.constant 0 : i32
    %c0_i32_0 = arith.constant 0 : i32
    %c0_i32_1 = arith.constant 0 : i32
    return %c0_i32, %c0_i32_0 : i32, i32
  }
  func.func @transform_9(%arg0: i32) -> (i32, i32) {
    %c0_i32 = arith.constant 0 : i32
    %c0_i32_0 = arith.constant 0 : i32
    return %arg0, %c0_i32 : i32, i32
  }
}

</mosaic_0001>

<llo_original>
// kernel: tpu_custom_call.1
$region0: #{tpu_custom_call.1}
  #allocation0 [shape = 'u32[]', space=smem, size = 0x4, offset = 0x4, fixed_abs, tag = 'smem constant byte address 0x4 - core index']
  #allocation1 [shape = 'u32[144,128]{1,0:T(1,128)}', space=vmem, size = 0x12000, scoped, tag = 'internal scratch']
  #allocation2 [shape = 'f32[1,1]{1,0:T(1,128)S(1)}', space=vmem, size = 0x200, scoped, tag = 'scoped memory for tpu_custom_call.1']
  %s0 = inlined_call_operand.vmem [shape: bf16[64,16], index: 0, kind: input, shape index: {}]
  %s1 = inlined_call_operand.vmem [shape: f32[8,8,1], index: 1, kind: input, shape index: {}]
  %s2 = inlined_call_operand.vmem [shape: f32[8,8,1], index: 2, kind: input, shape index: {}]
  %s3 = inlined_call_operand.vmem [shape: bf16[16,32], index: 3, kind: input, shape index: {}]
  %s4 = inlined_call_operand.vmem [shape: f32[1,32], index: 4, kind: input, shape index: {}]
  %s5 = inlined_call_operand.vmem [shape: bf16[32,32], index: 5, kind: input, shape index: {}]
  %s6 = inlined_call_operand.vmem [shape: f32[1,32], index: 6, kind: input, shape index: {}]
  %s7 = inlined_call_operand.vmem [shape: f32[1,32], index: 7, kind: input, shape index: {}]
  %s8 = inlined_call_operand.<no memory space> [shape: f32[1,1], index: 8, kind: input, shape index: {}]
  %s9 = inlined_call_operand.vmem [shape: f32[8,1], index: 9, kind: output, shape index: {}]
  %s10 = sld [smem:[#allocation0]]
  $region46: #{tpu_custom_call.1} parent=0
    _
  %s12 = ssub.s32 1, %s10
  %s13 = scalar_select 0, %s12, %s10
  %v14 = vstv %s8
  %15 = vst [vmem:[#allocation2] sm:$0x1] %v14
  // Predicated region
  $region2: #{tpu_custom_call.1} parent=0 // pred_check
    _
  $region3: #{tpu_custom_call.1} parent=0 // pred_check_branch
    %17 = sbr.rel (0) target = $region5
  $region4: #{tpu_custom_call.1} parent=0 // pred_region
    _
  $region5: #{tpu_custom_call.1} parent=0 // pred_fallthru
    _
  // Predicated region
  $region6: #{tpu_custom_call.1} parent=0 // pred_check
    _
  $region7: #{tpu_custom_call.1} parent=0 // pred_check_branch
    %19 = sbr.rel (0) target = $region9
  $region8: #{tpu_custom_call.1} parent=0 // pred_region
    _
  $region9: #{tpu_custom_call.1} parent=0 // pred_fallthru
    _
  // Predicated region
  $region10: #{tpu_custom_call.1} parent=0 // pred_check
    _
  $region11: #{tpu_custom_call.1} parent=0 // pred_check_branch
    %21 = sbr.rel (0) target = $region13
  $region12: #{tpu_custom_call.1} parent=0 // pred_region
    _
  $region13: #{tpu_custom_call.1} parent=0 // pred_fallthru
    _
  // Predicated region
  $region14: #{tpu_custom_call.1} parent=0 // pred_check
    _
  $region15: #{tpu_custom_call.1} parent=0 // pred_check_branch
    %23 = sbr.rel (0) target = $region17
  $region16: #{tpu_custom_call.1} parent=0 // pred_region
    _
  $region17: #{tpu_custom_call.1} parent=0 // pred_fallthru
    _
  // Predicated region
  $region18: #{tpu_custom_call.1} parent=0 // pred_check
    _
  $region19: #{tpu_custom_call.1} parent=0 // pred_check_branch
    %25 = sbr.rel (0) target = $region21
  $region20: #{tpu_custom_call.1} parent=0 // pred_region
    _
  $region21: #{tpu_custom_call.1} parent=0 // pred_fallthru
    _
  // Predicated region
  $region22: #{tpu_custom_call.1} parent=0 // pred_check
    _
  $region23: #{tpu_custom_call.1} parent=0 // pred_check_branch
    %27 = sbr.rel (0) target = $region25
  $region24: #{tpu_custom_call.1} parent=0 // pred_region
    _
  $region25: #{tpu_custom_call.1} parent=0 // pred_fallthru
    _
  // Predicated region
  $region26: #{tpu_custom_call.1} parent=0 // pred_check
    _
  $region27: #{tpu_custom_call.1} parent=0 // pred_check_branch
    %29 = sbr.rel (0) target = $region29
  $region28: #{tpu_custom_call.1} parent=0 // pred_region
    _
  $region29: #{tpu_custom_call.1} parent=0 // pred_fallthru
    _
  // Predicated region
  $region30: #{tpu_custom_call.1} parent=0 // pred_check
    _
  $region31: #{tpu_custom_call.1} parent=0 // pred_check_branch
    %31 = sbr.rel (0) target = $region33
  $region32: #{tpu_custom_call.1} parent=0 // pred_region
    _
  $region33: #{tpu_custom_call.1} parent=0 // pred_fallthru
    _
  // Predicated region
  $region34: #{tpu_custom_call.1} parent=0 // pred_check
    _
  $region35: #{tpu_custom_call.1} parent=0 // pred_check_branch
    %33 = sbr.rel (0) target = $region37
  $region36: #{tpu_custom_call.1} parent=0 // pred_region
    _
  $region37: #{tpu_custom_call.1} parent=0 // pred_fallthru
    _
  %v35 = vld [vmem:[%s0] sm:$0xf]
  %v36 = vld [vmem:[%s0 + $0x4] sm:$0xf]
  %v37 = vld [vmem:[%s0 + $0x8] sm:$0xf]
  %v38 = vld [vmem:[%s0 + $0xc] sm:$0xf]
  %v39 = vld [vmem:[%s0 + $0x10] sm:$0xf]
  %v40 = vld [vmem:[%s0 + $0x14] sm:$0xf]
  %v41 = vld [vmem:[%s0 + $0x18] sm:$0xf]
  %v42 = vld [vmem:[%s0 + $0x1c] sm:$0xf]
  %v43 = vld [vmem:[%s3] sm:$0xf]
  %v44 = vld [vmem:[%s3 + $0x4] sm:$0xf]
  %v45 = vld [vmem:[%s4] sm:$0x1]
  %v47 = vlaneseq
  %v48 = vshrl.u32 %v47, 7
  %v49 = vsub.s32 0, %v48
  %v50 = vrot.slane %v45, %v49
  %v60 = vunpack.c.l.b16 %v35
  %v61 = vunpack.c.l.b16 %v36
  %v62 = vunpack.c.l.b16 %v37
  %v63 = vunpack.c.l.b16 %v38
  %v64 = vunpack.c.l.b16 %v39
  %v65 = vunpack.c.l.b16 %v40
  %v66 = vunpack.c.l.b16 %v41
  %v67 = vunpack.c.l.b16 %v42
  %v68 = vpack.c.b16 %v61, %v60
  %v69 = vpack.c.b16 %v63, %v62
  %v70 = vpack.c.b16 %v65, %v64
  %v71 = vpack.c.b16 %v67, %v66
  %v74 = vunpack.c.l.b16 %v43
  %v75 = vunpack.c.l.b16 %v44
  %v76 = vpack.c.b16 %v75, %v74
  %vm78 = vcmask 130048
  %v80 = vsel %vm78, %v68, 0
  %v83 = vsel %vm78, %v69, 0
  %v86 = vsel %vm78, %v70, 0
  %v89 = vsel %vm78, %v71, 0
  %91 = vmatprep.subr.bf16.mxu0 0
  %92 = vmatpush1.bf16.msra.mxu0 %v76
  %93 = vmatprep.subr.bf16.mxu0 0
  %94 = vmatpush1.bf16.msra.mxu0 0
  %95 = vmatprep.subr.bf16.mxu0 0
  %96 = vmatpush1.bf16.msra.mxu0 0
  %97 = vmatprep.subr.bf16.mxu0 0
  %98 = vmatpush1.bf16.msra.mxu0 0
  %99 = vmatprep.subr.bf16.mxu0 0
  %100 = vmatpush1.bf16.msra.mxu0 0
  %101 = vmatprep.subr.bf16.mxu0 0
  %102 = vmatpush1.bf16.msra.mxu0 0
  %103 = vmatprep.subr.bf16.mxu0 0
  %104 = vmatpush1.bf16.msra.mxu0 0
  %105 = vmatprep.subr.bf16.mxu0 0
  %106 = vmatpush1.bf16.msra.mxu0 0
  %107 = vmatprep.subr.bf16.mxu0 0
  %108 = vmatpush1.bf16.msra.mxu0 0
  %109 = vmatprep.subr.bf16.mxu0 0
  %110 = vmatpush1.bf16.msra.mxu0 0
  %111 = vmatprep.subr.bf16.mxu0 0
  %112 = vmatpush1.bf16.msra.mxu0 0
  %113 = vmatprep.subr.bf16.mxu0 0
  %114 = vmatpush1.bf16.msra.mxu0 0
  %115 = vmatprep.subr.bf16.mxu0 0
  %116 = vmatpush1.bf16.msra.mxu0 0
  %117 = vmatprep.subr.bf16.mxu0 0
  %118 = vmatpush1.bf16.msra.mxu0 0
  %119 = vmatprep.subr.bf16.mxu0 0
  %120 = vmatpush1.bf16.msra.mxu0 0
  %121 = vmatprep.subr.bf16.mxu0 0
  %122 = vmatpush1.bf16.msra.mxu0 0
  %123 = vmatprep.mubr.bf16.mxu0 0
  %124 = vmatmul.mubr.bf16.gmra.mrb[0].mxu0 %v80
  %v125 = vpop.f32.mrb[0].mxu0
  %v126 = vadd.f32 %v50, %v125
  %v127 = vpop.f32.mrb[0].mxu0
  %v128 = vpop.f32.mrb[0].mxu0
  %v129 = vadd.f32 %v50, %v128
  %v130 = vpop.f32.mrb[0].mxu0
  %131 = vmatprep.mubr.bf16.mxu0 0
  %132 = vmatmul.mubr.bf16.gmra.mrb[0].mxu0 %v83
  %v133 = vpop.f32.mrb[0].mxu0
  %v134 = vadd.f32 %v50, %v133
  %v135 = vpop.f32.mrb[0].mxu0
  %v136 = vpop.f32.mrb[0].mxu0
  %v137 = vadd.f32 %v50, %v136
  %v138 = vpop.f32.mrb[0].mxu0
  %139 = vmatprep.mubr.bf16.mxu0 0
  %140 = vmatmul.mubr.bf16.gmra.mrb[0].mxu0 %v86
  %v141 = vpop.f32.mrb[0].mxu0
  %v142 = vadd.f32 %v50, %v141
  %v143 = vpop.f32.mrb[0].mxu0
  %v144 = vpop.f32.mrb[0].mxu0
  %v145 = vadd.f32 %v50, %v144
  %v146 = vpop.f32.mrb[0].mxu0
  %147 = vmatprep.mubr.bf16.mxu0 0
  %148 = vmatmul.mubr.bf16.gmra.mrb[0].mxu0 %v89
  %v149 = vpop.f32.mrb[0].mxu0
  %v150 = vadd.f32 %v50, %v149
  %v151 = vpop.f32.mrb[0].mxu0
  %v152 = vpop.f32.mrb[0].mxu0
  %v153 = vadd.f32 %v50, %v152
  %v154 = vpop.f32.mrb[0].mxu0
  %155 = vdwg.mxu0
  %v156 = vmul.f32 %v126, %v126
  %v157 = vmul.f32 %v129, %v129
  %v158 = vmul.f32 %v134, %v134
  %v159 = vmul.f32 %v137, %v137
  %v160 = vmul.f32 %v142, %v142
  %v161 = vmul.f32 %v145, %v145
  %v162 = vmul.f32 %v150, %v150
  %v163 = vmul.f32 %v153, %v153
  %v164 = vmul.f32 %v126, %v156
  %v165 = vmul.f32 %v129, %v157
  %v166 = vmul.f32 %v134, %v158
  %v167 = vmul.f32 %v137, %v159
  %v168 = vmul.f32 %v142, %v160
  %v169 = vmul.f32 %v145, %v161
  %v170 = vmul.f32 %v150, %v162
  %v171 = vmul.f32 %v153, %v163
  %v172 = vmul.f32 %v164, 0.044715
  %v173 = vmul.f32 %v165, 0.044715
  %v174 = vmul.f32 %v166, 0.044715
  %v175 = vmul.f32 %v167, 0.044715
  %v176 = vmul.f32 %v168, 0.044715
  %v177 = vmul.f32 %v169, 0.044715
  %v178 = vmul.f32 %v170, 0.044715
  %v179 = vmul.f32 %v171, 0.044715
  %v180 = vadd.f32 %v126, %v172
  %v181 = vadd.f32 %v129, %v173
  %v182 = vadd.f32 %v134, %v174
  %v183 = vadd.f32 %v137, %v175
  %v184 = vadd.f32 %v142, %v176
  %v185 = vadd.f32 %v145, %v177
  %v186 = vadd.f32 %v150, %v178
  %v187 = vadd.f32 %v153, %v179
  %v188 = vmul.f32 %v180, 0.7978846
  %v189 = vmul.f32 %v181, 0.7978846
  %v190 = vmul.f32 %v182, 0.7978846
  %v191 = vmul.f32 %v183, 0.7978846
  %v192 = vmul.f32 %v184, 0.7978846
  %v193 = vmul.f32 %v185, 0.7978846
  %v194 = vmul.f32 %v186, 0.7978846
  %v195 = vmul.f32 %v187, 0.7978846
  %v196 = vtanh.pop %v188
  %v197 = vtanh.pop %v189
  %v198 = vtanh.pop %v190
  %v199 = vtanh.pop %v191
  %v200 = vtanh.pop %v192
  %v201 = vtanh.pop %v193
  %v202 = vtanh.pop %v194
  %v203 = vtanh.pop %v195
  %v204 = vadd.f32 %v196, 1.0
  %v205 = vadd.f32 %v197, 1.0
  %v206 = vadd.f32 %v198, 1.0
  %v207 = vadd.f32 %v199, 1.0
  %v208 = vadd.f32 %v200, 1.0
  %v209 = vadd.f32 %v201, 1.0
  %v210 = vadd.f32 %v202, 1.0
  %v211 = vadd.f32 %v203, 1.0
  %v212 = vmul.f32 %v204, 0.5
  %v213 = vmul.f32 %v205, 0.5
  %v214 = vmul.f32 %v206, 0.5
  %v215 = vmul.f32 %v207, 0.5
  %v216 = vmul.f32 %v208, 0.5
  %v217 = vmul.f32 %v209, 0.5
  %v218 = vmul.f32 %v210, 0.5
  %v219 = vmul.f32 %v211, 0.5
  %v220 = vmul.f32 %v126, %v212
  %v221 = vmul.f32 %v129, %v213
  %v222 = vmul.f32 %v134, %v214
  %v223 = vmul.f32 %v137, %v215
  %v224 = vmul.f32 %v142, %v216
  %v225 = vmul.f32 %v145, %v217
  %v226 = vmul.f32 %v150, %v218
  %v227 = vmul.f32 %v153, %v219
  %v228 = vld [vmem:[%s5] sm:$0xf]
  %v229 = vld [vmem:[%s5 + $0x4] sm:$0xf]
  %v230 = vld [vmem:[%s5 + $0x8] sm:$0xf]
  %v231 = vld [vmem:[%s5 + $0xc] sm:$0xf]
  %v232 = vld [vmem:[%s6] sm:$0x1]
  %v233 = vpack.c.bf16 %v221, %v220
  %v234 = vpack.c.bf16 %v223, %v222
  %v235 = vpack.c.bf16 %v225, %v224
  %v236 = vpack.c.bf16 %v227, %v226
  %v238 = vlaneseq
  %v239 = vshrl.u32 %v238, 7
  %v240 = vsub.s32 0, %v239
  %v241 = vrot.slane %v232, %v240
  %v247 = vunpack.c.l.b16 %v228
  %v248 = vunpack.c.l.b16 %v229
  %v249 = vunpack.c.l.b16 %v230
  %v250 = vunpack.c.l.b16 %v231
  %v251 = vpack.c.b16 %v248, %v247
  %v252 = vpack.c.b16 %v250, %v249
  %vm255 = vcmask 261120
  %v257 = vsel %vm255, %v233, 0
  %v260 = vsel %vm255, %v234, 0
  %v263 = vsel %vm255, %v235, 0
  %v266 = vsel %vm255, %v236, 0
  %268 = vmatprep.subr.bf16.mxu0 0
  %269 = vmatpush1.bf16.msra.mxu0 %v251
  %270 = vmatprep.subr.bf16.mxu0 0
  %271 = vmatpush1.bf16.msra.mxu0 %v252
  %272 = vmatprep.subr.bf16.mxu0 0
  %273 = vmatpush1.bf16.msra.mxu0 0
  %274 = vmatprep.subr.bf16.mxu0 0
  %275 = vmatpush1.bf16.msra.mxu0 0
  %276 = vmatprep.subr.bf16.mxu0 0
  %277 = vmatpush1.bf16.msra.mxu0 0
  %278 = vmatprep.subr.bf16.mxu0 0
  %279 = vmatpush1.bf16.msra.mxu0 0
  %280 = vmatprep.subr.bf16.mxu0 0
  %281 = vmatpush1.bf16.msra.mxu0 0
  %282 = vmatprep.subr.bf16.mxu0 0
  %283 = vmatpush1.bf16.msra.mxu0 0
  %284 = vmatprep.subr.bf16.mxu0 0
  %285 = vmatpush1.bf16.msra.mxu0 0
  %286 = vmatprep.subr.bf16.mxu0 0
  %287 = vmatpush1.bf16.msra.mxu0 0
  %288 = vmatprep.subr.bf16.mxu0 0
  %289 = vmatpush1.bf16.msra.mxu0 0
  %290 = vmatprep.subr.bf16.mxu0 0
  %291 = vmatpush1.bf16.msra.mxu0 0
  %292 = vmatprep.subr.bf16.mxu0 0
  %293 = vmatpush1.bf16.msra.mxu0 0
  %294 = vmatprep.subr.bf16.mxu0 0
  %295 = vmatpush1.bf16.msra.mxu0 0
  %296 = vmatprep.subr.bf16.mxu0 0
  %297 = vmatpush1.bf16.msra.mxu0 0
  %298 = vmatprep.subr.bf16.mxu0 0
  %299 = vmatpush1.bf16.msra.mxu0 0
  %300 = vmatprep.mubr.bf16.mxu0 0
  %301 = vmatmul.mubr.bf16.gmra.mrb[0].mxu0 %v257
  %v302 = vpop.f32.mrb[0].mxu0
  %v303 = vadd.f32 %v241, %v302
  %v304 = vpop.f32.mrb[0].mxu0
  %v305 = vpop.f32.mrb[0].mxu0
  %v306 = vadd.f32 %v241, %v305
  %v307 = vpop.f32.mrb[0].mxu0
  %308 = vmatprep.mubr.bf16.mxu0 0
  %309 = vmatmul.mubr.bf16.gmra.mrb[0].mxu0 %v260
  %v310 = vpop.f32.mrb[0].mxu0
  %v311 = vadd.f32 %v241, %v310
  %v312 = vpop.f32.mrb[0].mxu0
  %v313 = vpop.f32.mrb[0].mxu0
  %v314 = vadd.f32 %v241, %v313
  %v315 = vpop.f32.mrb[0].mxu0
  %316 = vmatprep.mubr.bf16.mxu0 0
  %317 = vmatmul.mubr.bf16.gmra.mrb[0].mxu0 %v263
  %v318 = vpop.f32.mrb[0].mxu0
  %v319 = vadd.f32 %v241, %v318
  %v320 = vpop.f32.mrb[0].mxu0
  %v321 = vpop.f32.mrb[0].mxu0
  %v322 = vadd.f32 %v241, %v321
  %v323 = vpop.f32.mrb[0].mxu0
  %324 = vmatprep.mubr.bf16.mxu0 0
  %325 = vmatmul.mubr.bf16.gmra.mrb[0].mxu0 %v266
  %v326 = vpop.f32.mrb[0].mxu0
  %v327 = vadd.f32 %v241, %v326
  %v328 = vpop.f32.mrb[0].mxu0
  %v329 = vpop.f32.mrb[0].mxu0
  %v330 = vadd.f32 %v241, %v329
  %v331 = vpop.f32.mrb[0].mxu0
  %332 = vdwg.mxu0
  %v333 = vmul.f32 %v303, %v303
  %v334 = vmul.f32 %v306, %v306
  %v335 = vmul.f32 %v311, %v311
  %v336 = vmul.f32 %v314, %v314
  %v337 = vmul.f32 %v319, %v319
  %v338 = vmul.f32 %v322, %v322
  %v339 = vmul.f32 %v327, %v327
  %v340 = vmul.f32 %v330, %v330
  %v341 = vmul.f32 %v303, %v333
  %v342 = vmul.f32 %v306, %v334
  %v343 = vmul.f32 %v311, %v335
  %v344 = vmul.f32 %v314, %v336
  %v345 = vmul.f32 %v319, %v337
  %v346 = vmul.f32 %v322, %v338
  %v347 = vmul.f32 %v327, %v339
  %v348 = vmul.f32 %v330, %v340
  %v349 = vmul.f32 %v341, 0.044715
  %v350 = vmul.f32 %v342, 0.044715
  %v351 = vmul.f32 %v343, 0.044715
  %v352 = vmul.f32 %v344, 0.044715
  %v353 = vmul.f32 %v345, 0.044715
  %v354 = vmul.f32 %v346, 0.044715
  %v355 = vmul.f32 %v347, 0.044715
  %v356 = vmul.f32 %v348, 0.044715
  %v357 = vadd.f32 %v303, %v349
  %v358 = vadd.f32 %v306, %v350
  %v359 = vadd.f32 %v311, %v351
  %v360 = vadd.f32 %v314, %v352
  %v361 = vadd.f32 %v319, %v353
  %v362 = vadd.f32 %v322, %v354
  %v363 = vadd.f32 %v327, %v355
  %v364 = vadd.f32 %v330, %v356
  %v365 = vmul.f32 %v357, 0.7978846
  %v366 = vmul.f32 %v358, 0.7978846
  %v367 = vmul.f32 %v359, 0.7978846
  %v368 = vmul.f32 %v360, 0.7978846
  %v369 = vmul.f32 %v361, 0.7978846
  %v370 = vmul.f32 %v362, 0.7978846
  %v371 = vmul.f32 %v363, 0.7978846
  %v372 = vmul.f32 %v364, 0.7978846
  %v373 = vtanh.pop %v365
  %v374 = vtanh.pop %v366
  %v375 = vtanh.pop %v367
  %v376 = vtanh.pop %v368
  %v377 = vtanh.pop %v369
  %v378 = vtanh.pop %v370
  %v379 = vtanh.pop %v371
  %v380 = vtanh.pop %v372
  %v381 = vadd.f32 %v373, 1.0
  %v382 = vadd.f32 %v374, 1.0
  %v383 = vadd.f32 %v375, 1.0
  %v384 = vadd.f32 %v376, 1.0
  %v385 = vadd.f32 %v377, 1.0
  %v386 = vadd.f32 %v378, 1.0
  %v387 = vadd.f32 %v379, 1.0
  %v388 = vadd.f32 %v380, 1.0
  %v389 = vmul.f32 %v381, 0.5
  %v390 = vmul.f32 %v382, 0.5
  %v391 = vmul.f32 %v383, 0.5
  %v392 = vmul.f32 %v384, 0.5
  %v393 = vmul.f32 %v385, 0.5
  %v394 = vmul.f32 %v386, 0.5
  %v395 = vmul.f32 %v387, 0.5
  %v396 = vmul.f32 %v388, 0.5
  %v397 = vmul.f32 %v303, %v389
  %v398 = vmul.f32 %v306, %v390
  %v399 = vmul.f32 %v311, %v391
  %v400 = vmul.f32 %v314, %v392
  %v401 = vmul.f32 %v319, %v393
  %v402 = vmul.f32 %v322, %v394
  %v403 = vmul.f32 %v327, %v395
  %v404 = vmul.f32 %v330, %v396
  %v405 = vld [vmem:[%s7] sm:$0x1]
  %v407 = vlaneseq
  %v408 = vshrl.u32 %v407, 7
  %v409 = vsub.s32 0, %v408
  %v410 = vrot.slane %v405, %v409
  %v412 = vmul.f32 %v397, %v410
  %v413 = vmul.f32 %v398, %v410
  %v414 = vmul.f32 %v399, %v410
  %v415 = vmul.f32 %v400, %v410
  %v416 = vmul.f32 %v401, %v410
  %v417 = vmul.f32 %v402, %v410
  %v418 = vmul.f32 %v403, %v410
  %v419 = vmul.f32 %v404, %v410
  %v420 = vsel %vm255, %v412, 0.0
  %421 = vadd.xlane.f32.xlu0 %v420
  %v422 = vpop.xlane.xlu0 %421
  %v423 = vsel %vm255, %v413, 0.0
  %424 = vadd.xlane.f32.xlu0 %v423
  %v425 = vpop.xlane.xlu0 %424
  %v426 = vsel %vm255, %v414, 0.0
  %427 = vadd.xlane.f32.xlu0 %v426
  %v428 = vpop.xlane.xlu0 %427
  %v429 = vsel %vm255, %v415, 0.0
  %430 = vadd.xlane.f32.xlu0 %v429
  %v431 = vpop.xlane.xlu0 %430
  %v432 = vsel %vm255, %v416, 0.0
  %433 = vadd.xlane.f32.xlu0 %v432
  %v434 = vpop.xlane.xlu0 %433
  %v435 = vsel %vm255, %v417, 0.0
  %436 = vadd.xlane.f32.xlu0 %v435
  %v437 = vpop.xlane.xlu0 %436
  %v438 = vsel %vm255, %v418, 0.0
  %439 = vadd.xlane.f32.xlu0 %v438
  %v440 = vpop.xlane.xlu0 %439
  %v441 = vsel %vm255, %v419, 0.0
  %442 = vadd.xlane.f32.xlu0 %v441
  %v443 = vpop.xlane.xlu0 %442
  %v444 = vld [vmem:[#allocation2] sm:$0x1]
  %v446 = vlaneseq
  %v447 = vshrl.u32 %v446, 7
  %v448 = vsub.s32 0, %v447
  %v449 = vrot.slane %v444, %v448
  %v451 = vadd.f32 %v422, %v449
  %v452 = vadd.f32 %v425, %v449
  %v453 = vadd.f32 %v428, %v449
  %v454 = vadd.f32 %v431, %v449
  %v455 = vadd.f32 %v434, %v449
  %v456 = vadd.f32 %v437, %v449
  %v457 = vadd.f32 %v440, %v449
  %v458 = vadd.f32 %v443, %v449
  %v459 = vld [vmem:[%s1] sm:$0xff]
  %v460 = vld [vmem:[%s1 + $0x8] sm:$0xff]
  %v461 = vld [vmem:[%s1 + $0x10] sm:$0xff]
  %v462 = vld [vmem:[%s1 + $0x18] sm:$0xff]
  %v463 = vld [vmem:[%s1 + $0x20] sm:$0xff]
  %v464 = vld [vmem:[%s1 + $0x28] sm:$0xff]
  %v465 = vld [vmem:[%s1 + $0x30] sm:$0xff]
  %v466 = vld [vmem:[%s1 + $0x38] sm:$0xff]
  %v467 = vld [vmem:[%s2] sm:$0xff]
  %v468 = vld [vmem:[%s2 + $0x8] sm:$0xff]
  %v469 = vld [vmem:[%s2 + $0x10] sm:$0xff]
  %v470 = vld [vmem:[%s2 + $0x18] sm:$0xff]
  %v471 = vld [vmem:[%s2 + $0x20] sm:$0xff]
  %v472 = vld [vmem:[%s2 + $0x28] sm:$0xff]
  %v473 = vld [vmem:[%s2 + $0x30] sm:$0xff]
  %v474 = vld [vmem:[%s2 + $0x38] sm:$0xff]
  %vm475 = vcmask 7168
  %v476 = vsel %vm475, %v451, -inf
  %v477 = vrot.slane %v476, 4
  %v478 = vmax.f32 %v476, %v477
  %v479 = vrot.slane %v478, 2
  %v480 = vmax.f32 %v478, %v479
  %v481 = vrot.slane %v480, 1
  %v482 = vmax.f32 %v480, %v481
  %v483 = vsel %vm475, %v452, -inf
  %v484 = vrot.slane %v483, 4
  %v485 = vmax.f32 %v483, %v484
  %v486 = vrot.slane %v485, 2
  %v487 = vmax.f32 %v485, %v486
  %v488 = vrot.slane %v487, 1
  %v489 = vmax.f32 %v487, %v488
  %v490 = vsel %vm475, %v453, -inf
  %v491 = vrot.slane %v490, 4
  %v492 = vmax.f32 %v490, %v491
  %v493 = vrot.slane %v492, 2
  %v494 = vmax.f32 %v492, %v493
  %v495 = vrot.slane %v494, 1
  %v496 = vmax.f32 %v494, %v495
  %v497 = vsel %vm475, %v454, -inf
  %v498 = vrot.slane %v497, 4
  %v499 = vmax.f32 %v497, %v498
  %v500 = vrot.slane %v499, 2
  %v501 = vmax.f32 %v499, %v500
  %v502 = vrot.slane %v501, 1
  %v503 = vmax.f32 %v501, %v502
  %v504 = vsel %vm475, %v455, -inf
  %v505 = vrot.slane %v504, 4
  %v506 = vmax.f32 %v504, %v505
  %v507 = vrot.slane %v506, 2
  %v508 = vmax.f32 %v506, %v507
  %v509 = vrot.slane %v508, 1
  %v510 = vmax.f32 %v508, %v509
  %v511 = vsel %vm475, %v456, -inf
  %v512 = vrot.slane %v511, 4
  %v513 = vmax.f32 %v511, %v512
  %v514 = vrot.slane %v513, 2
  %v515 = vmax.f32 %v513, %v514
  %v516 = vrot.slane %v515, 1
  %v517 = vmax.f32 %v515, %v516
  %v518 = vsel %vm475, %v457, -inf
  %v519 = vrot.slane %v518, 4
  %v520 = vmax.f32 %v518, %v519
  %v521 = vrot.slane %v520, 2
  %v522 = vmax.f32 %v520, %v521
  %v523 = vrot.slane %v522, 1
  %v524 = vmax.f32 %v522, %v523
  %v525 = vsel %vm475, %v458, -inf
  %v526 = vrot.slane %v525, 4
  %v527 = vmax.f32 %v525, %v526
  %v528 = vrot.slane %v527, 2
  %v529 = vmax.f32 %v527, %v528
  %v530 = vrot.slane %v529, 1
  %v531 = vmax.f32 %v529, %v530
  %v532 = vsub.f32 %v451, %v482
  %v533 = vsub.f32 %v452, %v489
  %v534 = vsub.f32 %v453, %v496
  %v535 = vsub.f32 %v454, %v503
  %v536 = vsub.f32 %v455, %v510
  %v537 = vsub.f32 %v456, %v517
  %v538 = vsub.f32 %v457, %v524
  %v539 = vsub.f32 %v458, %v531
  %v540 = vmul.f32 %v532, 1.442695
  %v541 = vpow.pop %v540
  %v542 = vmul.f32 %v533, 1.442695
  %v543 = vpow.pop %v542
  %v544 = vmul.f32 %v534, 1.442695
  %v545 = vpow.pop %v544
  %v546 = vmul.f32 %v535, 1.442695
  %v547 = vpow.pop %v546
  %v548 = vmul.f32 %v536, 1.442695
  %v549 = vpow.pop %v548
  %v550 = vmul.f32 %v537, 1.442695
  %v551 = vpow.pop %v550
  %v552 = vmul.f32 %v538, 1.442695
  %v553 = vpow.pop %v552
  %v554 = vmul.f32 %v539, 1.442695
  %v555 = vpow.pop %v554
  %v556 = vsel %vm475, %v541, 0.0
  %v557 = vrot.slane %v556, 4
  %v558 = vadd.f32 %v556, %v557
  %v559 = vrot.slane %v558, 2
  %v560 = vadd.f32 %v558, %v559
  %v561 = vrot.slane %v560, 1
  %v562 = vadd.f32 %v560, %v561
  %v563 = vsel %vm475, %v543, 0.0
  %v564 = vrot.slane %v563, 4
  %v565 = vadd.f32 %v563, %v564
  %v566 = vrot.slane %v565, 2
  %v567 = vadd.f32 %v565, %v566
  %v568 = vrot.slane %v567, 1
  %v569 = vadd.f32 %v567, %v568
  %v570 = vsel %vm475, %v545, 0.0
  %v571 = vrot.slane %v570, 4
  %v572 = vadd.f32 %v570, %v571
  %v573 = vrot.slane %v572, 2
  %v574 = vadd.f32 %v572, %v573
  %v575 = vrot.slane %v574, 1
  %v576 = vadd.f32 %v574, %v575
  %v577 = vsel %vm475, %v547, 0.0
  %v578 = vrot.slane %v577, 4
  %v579 = vadd.f32 %v577, %v578
  %v580 = vrot.slane %v579, 2
  %v581 = vadd.f32 %v579, %v580
  %v582 = vrot.slane %v581, 1
  %v583 = vadd.f32 %v581, %v582
  %v584 = vsel %vm475, %v549, 0.0
  %v585 = vrot.slane %v584, 4
  %v586 = vadd.f32 %v584, %v585
  %v587 = vrot.slane %v586, 2
  %v588 = vadd.f32 %v586, %v587
  %v589 = vrot.slane %v588, 1
  %v590 = vadd.f32 %v588, %v589
  %v591 = vsel %vm475, %v551, 0.0
  %v592 = vrot.slane %v591, 4
  %v593 = vadd.f32 %v591, %v592
  %v594 = vrot.slane %v593, 2
  %v595 = vadd.f32 %v593, %v594
  %v596 = vrot.slane %v595, 1
  %v597 = vadd.f32 %v595, %v596
  %v598 = vsel %vm475, %v553, 0.0
  %v599 = vrot.slane %v598, 4
  %v600 = vadd.f32 %v598, %v599
  %v601 = vrot.slane %v600, 2
  %v602 = vadd.f32 %v600, %v601
  %v603 = vrot.slane %v602, 1
  %v604 = vadd.f32 %v602, %v603
  %v605 = vsel %vm475, %v555, 0.0
  %v606 = vrot.slane %v605, 4
  %v607 = vadd.f32 %v605, %v606
  %v608 = vrot.slane %v607, 2
  %v609 = vadd.f32 %v607, %v608
  %v610 = vrot.slane %v609, 1
  %v611 = vadd.f32 %v609, %v610
  %v612 = vrcp.pop %v562
  %v613 = vrcp.pop %v569
  %v614 = vrcp.pop %v576
  %v615 = vrcp.pop %v583
  %v616 = vrcp.pop %v590
  %v617 = vrcp.pop %v597
  %v618 = vrcp.pop %v604
  %v619 = vrcp.pop %v611
  %v620 = vmul.f32 %v541, %v612
  %v621 = vmul.f32 %v543, %v613
  %v622 = vmul.f32 %v545, %v614
  %v623 = vmul.f32 %v547, %v615
  %v624 = vmul.f32 %v549, %v616
  %v625 = vmul.f32 %v551, %v617
  %v626 = vmul.f32 %v553, %v618
  %v627 = vmul.f32 %v555, %v619
  %v628 = vmul.f32 %v620, %v467
  %v629 = vmul.f32 %v621, %v468
  %v630 = vmul.f32 %v622, %v469
  %v631 = vmul.f32 %v623, %v470
  %v632 = vmul.f32 %v624, %v471
  %v633 = vmul.f32 %v625, %v472
  %v634 = vmul.f32 %v626, %v473
  %v635 = vmul.f32 %v627, %v474
  %v636 = vsel %vm475, %v628, 0.0
  %v637 = vrot.slane %v636, 4
  %v638 = vadd.f32 %v636, %v637
  %v639 = vrot.slane %v638, 2
  %v640 = vadd.f32 %v638, %v639
  %v641 = vrot.slane %v640, 1
  %v642 = vadd.f32 %v640, %v641
  %v643 = vsel %vm475, %v629, 0.0
  %v644 = vrot.slane %v643, 4
  %v645 = vadd.f32 %v643, %v644
  %v646 = vrot.slane %v645, 2
  %v647 = vadd.f32 %v645, %v646
  %v648 = vrot.slane %v647, 1
  %v649 = vadd.f32 %v647, %v648
  %v650 = vsel %vm475, %v630, 0.0
  %v651 = vrot.slane %v650, 4
  %v652 = vadd.f32 %v650, %v651
  %v653 = vrot.slane %v652, 2
  %v654 = vadd.f32 %v652, %v653
  %v655 = vrot.slane %v654, 1
  %v656 = vadd.f32 %v654, %v655
  %v657 = vsel %vm475, %v631, 0.0
  %v658 = vrot.slane %v657, 4
  %v659 = vadd.f32 %v657, %v658
  %v660 = vrot.slane %v659, 2
  %v661 = vadd.f32 %v659, %v660
  %v662 = vrot.slane %v661, 1
  %v663 = vadd.f32 %v661, %v662
  %v664 = vsel %vm475, %v632, 0.0
  %v665 = vrot.slane %v664, 4
  %v666 = vadd.f32 %v664, %v665
  %v667 = vrot.slane %v666, 2
  %v668 = vadd.f32 %v666, %v667
  %v669 = vrot.slane %v668, 1
  %v670 = vadd.f32 %v668, %v669
  %v671 = vsel %vm475, %v633, 0.0
  %v672 = vrot.slane %v671, 4
  %v673 = vadd.f32 %v671, %v672
  %v674 = vrot.slane %v673, 2
  %v675 = vadd.f32 %v673, %v674
  %v676 = vrot.slane %v675, 1
  %v677 = vadd.f32 %v675, %v676
  %v678 = vsel %vm475, %v634, 0.0
  %v679 = vrot.slane %v678, 4
  %v680 = vadd.f32 %v678, %v679
  %v681 = vrot.slane %v680, 2
  %v682 = vadd.f32 %v680, %v681
  %v683 = vrot.slane %v682, 1
  %v684 = vadd.f32 %v682, %v683
  %v685 = vsel %vm475, %v635, 0.0
  %v686 = vrot.slane %v685, 4
  %v687 = vadd.f32 %v685, %v686
  %v688 = vrot.slane %v687, 2
  %v689 = vadd.f32 %v687, %v688
  %v690 = vrot.slane %v689, 1
  %v691 = vadd.f32 %v689, %v690
  %v692 = vadd.f32 %v642, 1e-08
  %v693 = vadd.f32 %v649, 1e-08
  %v694 = vadd.f32 %v656, 1e-08
  %v695 = vadd.f32 %v663, 1e-08
  %v696 = vadd.f32 %v670, 1e-08
  %v697 = vadd.f32 %v677, 1e-08
  %v698 = vadd.f32 %v684, 1e-08
  %v699 = vadd.f32 %v691, 1e-08
  %v700 = vrcp.pop %v692
  %v701 = vmul.f32 %v628, %v700
  %v702 = vrcp.pop %v693
  %v703 = vmul.f32 %v629, %v702
  %v704 = vrcp.pop %v694
  %v705 = vmul.f32 %v630, %v704
  %v706 = vrcp.pop %v695
  %v707 = vmul.f32 %v631, %v706
  %v708 = vrcp.pop %v696
  %v709 = vmul.f32 %v632, %v708
  %v710 = vrcp.pop %v697
  %v711 = vmul.f32 %v633, %v710
  %v712 = vrcp.pop %v698
  %v713 = vmul.f32 %v634, %v712
  %v714 = vrcp.pop %v699
  %v715 = vmul.f32 %v635, %v714
  %v716 = vmul.f32 %v459, %v701
  %v717 = vmul.f32 %v460, %v703
  %v718 = vmul.f32 %v461, %v705
  %v719 = vmul.f32 %v462, %v707
  %v720 = vmul.f32 %v463, %v709
  %v721 = vmul.f32 %v464, %v711
  %v722 = vmul.f32 %v465, %v713
  %v723 = vmul.f32 %v466, %v715
  %v724 = vsel %vm475, %v716, 0.0
  %v725 = vrot.slane %v724, 4
  %v726 = vadd.f32 %v724, %v725
  %v727 = vrot.slane %v726, 2
  %v728 = vadd.f32 %v726, %v727
  %v729 = vrot.slane %v728, 1
  %v730 = vadd.f32 %v728, %v729
  %v731 = vsel %vm475, %v717, 0.0
  %v732 = vrot.slane %v731, 4
  %v733 = vadd.f32 %v731, %v732
  %v734 = vrot.slane %v733, 2
  %v735 = vadd.f32 %v733, %v734
  %v736 = vrot.slane %v735, 1
  %v737 = vadd.f32 %v735, %v736
  %v738 = vsel %vm475, %v718, 0.0
  %v739 = vrot.slane %v738, 4
  %v740 = vadd.f32 %v738, %v739
  %v741 = vrot.slane %v740, 2
  %v742 = vadd.f32 %v740, %v741
  %v743 = vrot.slane %v742, 1
  %v744 = vadd.f32 %v742, %v743
  %v745 = vsel %vm475, %v719, 0.0
  %v746 = vrot.slane %v745, 4
  %v747 = vadd.f32 %v745, %v746
  %v748 = vrot.slane %v747, 2
  %v749 = vadd.f32 %v747, %v748
  %v750 = vrot.slane %v749, 1
  %v751 = vadd.f32 %v749, %v750
  %v752 = vsel %vm475, %v720, 0.0
  %v753 = vrot.slane %v752, 4
  %v754 = vadd.f32 %v752, %v753
  %v755 = vrot.slane %v754, 2
  %v756 = vadd.f32 %v754, %v755
  %v757 = vrot.slane %v756, 1
  %v758 = vadd.f32 %v756, %v757
  %v759 = vsel %vm475, %v721, 0.0
  %v760 = vrot.slane %v759, 4
  %v761 = vadd.f32 %v759, %v760
  %v762 = vrot.slane %v761, 2
  %v763 = vadd.f32 %v761, %v762
  %v764 = vrot.slane %v763, 1
  %v765 = vadd.f32 %v763, %v764
  %v766 = vsel %vm475, %v722, 0.0
  %v767 = vrot.slane %v766, 4
  %v768 = vadd.f32 %v766, %v767
  %v769 = vrot.slane %v768, 2
  %v770 = vadd.f32 %v768, %v769
  %v771 = vrot.slane %v770, 1
  %v772 = vadd.f32 %v770, %v771
  %v773 = vsel %vm475, %v723, 0.0
  %v774 = vrot.slane %v773, 4
  %v775 = vadd.f32 %v773, %v774
  %v776 = vrot.slane %v775, 2
  %v777 = vadd.f32 %v775, %v776
  %v778 = vrot.slane %v777, 1
  %v779 = vadd.f32 %v777, %v778
  %vm788 = vcmask 1041409
  %v789 = vsel %vm788, %v737, %v730
  %vm790 = vcmask 1042434
  %v791 = vsel %vm790, %v744, %v789
  %vm792 = vcmask 1043459
  %v793 = vsel %vm792, %v751, %v791
  %vm794 = vcmask 1044484
  %v795 = vsel %vm794, %v758, %v793
  %vm796 = vcmask 1045509
  %v797 = vsel %vm796, %v765, %v795
  %vm798 = vcmask 1046534
  %v799 = vsel %vm798, %v772, %v797
  %vm800 = vcmask 1047559
  %v801 = vsel %vm800, %v779, %v799
  %803 = vst.msk [vmem:[%s9] sm:$0xff] %vm475, %v801
  // Predicated region
  $region38: #{tpu_custom_call.1} parent=0 // pred_check
    _
  $region39: #{tpu_custom_call.1} parent=0 // pred_check_branch
    %805 = sbr.rel (0) target = $region41
  $region40: #{tpu_custom_call.1} parent=0 // pred_region
    _
  $region41: #{tpu_custom_call.1} parent=0 // pred_fallthru
    _
  // Predicated region
  $region42: #{tpu_custom_call.1} parent=0 // pred_check
    _
  $region43: #{tpu_custom_call.1} parent=0 // pred_check_branch
    %807 = sbr.rel (0) target = $region45
  $region44: #{tpu_custom_call.1} parent=0 // pred_region
    _
  $region45: #{tpu_custom_call.1} parent=0 // pred_fallthru
    _

</llo_original>
